<compile_context>
chip_gen: v7x
topology: tpu7x:2x2x1
jax: 0.10.0
libtpu: 0.0.40
codegen_flags: <defaults>
</compile_context>

<pallas_src>
import functools

import jax
import jax.numpy as jnp
from jax.experimental import pallas as pl
from jax.experimental.pallas import tpu as pltpu

OPS_USED = ("zero", "skip_connect", "conv_1x1")
NUM_OPS = len(OPS_USED)

LANE = 128     # lane width (last dim)
SUBLANE = 8    # f32 sublane multiple (second-to-last dim)


def _round_up(x, m):
    return (x + m - 1) // m * m


def _gcell_kernel(*refs, j_parts):
    """refs = (x_0, ..., x_{J-1}, w_stack, out).

    x_j     : (C, TM)    part-j activations; channels on sublanes, TM spatial
                         positions on lanes (lane-dense loads/stores).
    w_stack : (J, C, C)  folded weights (softmax(alpha), softmax(beta), K
                         already applied in f32 in the wrapper).
    out     : (C, TM)    relu( sum_j w_stack[j] @ x_j )
    """
    x_refs = refs[:j_parts]
    w_ref = refs[j_parts]
    out_ref = refs[j_parts + 1]

    # Accumulated per-part MXU dots (no in-kernel concatenate): each pipelined
    # input buffer is consumed directly; w_ref[j] with static j is a zero-cost
    # leading-axis offset.
    acc = jnp.dot(w_ref[0], x_refs[0][...], preferred_element_type=jnp.float32)
    for j in range(1, j_parts):
        acc = acc + jnp.dot(w_ref[j], x_refs[j][...],
                            preferred_element_type=jnp.float32)
    out_ref[...] = jnp.maximum(acc, 0.0).astype(out_ref.dtype)  # relu


def _choose_tm(hw_p, n, c_p, j_parts, itemsize, tm_max=2048,
               vmem_io_budget=12 * 1024 * 1024):
    """Largest lane-aligned tile dividing hw_p, capped by tm_max and by the
    double-buffered VMEM I/O budget; keeps >=2 grid programs when possible so
    both v7x TensorCores get work (1 TC on v5e/v6e: harmless)."""
    divs = [t for t in range(LANE, hw_p + 1, LANE) if hw_p % t == 0]
    bytes_per_col = 2 * (j_parts + 1) * c_p * itemsize   # dbl-buffered I/O
    cap = min(tm_max, max(LANE, vmem_io_budget // bytes_per_col))
    ok = [t for t in divs if t <= cap] or [divs[0]]
    tm = ok[-1]
    if n * (hw_p // tm) < 2:                              # keep 2 TCs busy
        smaller = [t for t in ok if hw_p // t >= 2]
        if smaller:
            tm = smaller[-1]
    return tm


def gcell_forward(prevs_nchw, alpha_weights, beta_weights, conv_weights,
                  tm_max=2048):
    """prevs_nchw: list of J arrays (N, C, H, W); conv_weights: list of (C, C, 1, 1)."""
    j_parts = len(prevs_nchw)
    n, c, h, w = prevs_nchw[0].shape
    hw = h * w
    dtype = prevs_nchw[0].dtype
    itemsize = jnp.dtype(dtype).itemsize

    c_p = _round_up(c, SUBLANE)
    hw_p = _round_up(hw, LANE)

    # ---- fold softmax(alpha), softmax(beta), K into one (J, C, C) weight ----
    # mixed_j = K*(a_j0*0 + a_j1*x_j + a_j2*(W_j x_j));  out = relu(sum_j b_j*mixed_j)
    #   => out = relu( sum_j Wfold_j @ x_j ),  Wfold_j = K*b_j*(a_j1*I + a_j2*W_j)
    # Fold done in f32 (keeps mixing-scalar precision); cast once at the end.
    alphas = jax.nn.softmax(alpha_weights.astype(jnp.float32), axis=-1)  # (J, K)
    betas = jax.nn.softmax(beta_weights.astype(jnp.float32), axis=-1)    # (J,)
    eye = jnp.eye(c, dtype=jnp.float32)
    blocks = []
    for j in range(j_parts):
        wj = conv_weights[j][:, :, 0, 0].astype(jnp.float32)             # (Cout, Cin)
        bj = NUM_OPS * betas[j] * (alphas[j, 1] * eye + alphas[j, 2] * wj)
        if c_p != c:
            bj = jnp.pad(bj, ((0, c_p - c), (0, c_p - c)))
        blocks.append(bj)
    w_stack = jnp.stack(blocks, axis=0).astype(dtype)                    # (J, Cp, Cp)

    # NCHW -> (N, C, H*W): pure reshape.  Pad channels to the sublane multiple
    # and H*W to the lane multiple only when needed (keeps the output store
    # lane-dense, no masked vst; padded zeros pass through relu as zeros).
    xs = []
    for p in prevs_nchw:
        x = p.reshape(n, c, hw)
        if c_p != c or hw_p != hw:
            x = jnp.pad(x, ((0, 0), (0, c_p - c), (0, hw_p - hw)))
        xs.append(x)

    tm = _choose_tm(hw_p, n, c_p, j_parts, itemsize, tm_max=tm_max)
    grid = (n, hw_p // tm)

    x_spec = pl.BlockSpec((None, c_p, tm), lambda b, i: (b, 0, i))
    # Constant index_map: the (J, Cp, Cp) weight is DMA'd once and stays
    # resident across the grid.  It is tiny here; at large C additionally
    # single-buffer it (pipeline_mode=pl.Buffered(1)) to halve its VMEM use.
    w_spec = pl.BlockSpec((j_parts, c_p, c_p), lambda b, i: (0, 0, 0))
    o_spec = pl.BlockSpec((None, c_p, tm), lambda b, i: (b, 0, i))

    flops = 2 * n * hw_p * c_p * c_p * j_parts
    bytes_accessed = ((j_parts + 1) * n * c_p * hw_p
                      + j_parts * c_p * c_p) * itemsize
    # Scoped-VMEM limit sized to the actual working set + headroom (v5e's
    # default is only 16 MiB; never request more than v7x's 64 MiB physical).
    need = (2 * (j_parts + 1) * c_p * tm + 2 * j_parts * c_p * c_p) * itemsize
    vmem_limit = int(min(max(2 * need, 16 * 1024 * 1024), 64 * 1024 * 1024))

    out = pl.pallas_call(
        functools.partial(_gcell_kernel, j_parts=j_parts),
        out_shape=jax.ShapeDtypeStruct((n, c_p, hw_p), dtype),
        grid_spec=pltpu.PrefetchScalarGridSpec(
            num_scalar_prefetch=0,
            grid=grid,
            in_specs=[x_spec] * j_parts + [w_spec],
            out_specs=o_spec,
        ),
        compiler_params=pltpu.CompilerParams(
            dimension_semantics=("parallel", "parallel"),
            vmem_limit_bytes=vmem_limit),
        cost_estimate=pl.CostEstimate(
            flops=flops, transcendentals=0, bytes_accessed=bytes_accessed),
    )(*xs, w_stack)

    if c_p != c or hw_p != hw:
        out = out[:, :c, :hw]
    # (N, C, H*W) -> NCHW: pure reshape, no transpose.
    return out.reshape(n, c, h, w)


def gcell_reference(prevs_nchw, alpha_weights, beta_weights, conv_weights):
    """Pure-JAX reference mirroring the PyTorch forward (NCHW)."""
    alphas = jax.nn.softmax(alpha_weights, axis=-1)
    betas = jax.nn.softmax(beta_weights, axis=-1)
    mix = 0.0
    for j, x in enumerate(prevs_nchw):
        wmat = conv_weights[j][:, :, 0, 0]                          # (Cout, Cin)
        conv = jnp.einsum('nchw,oc->nohw', x, wmat)
        mixed = NUM_OPS * (alphas[j, 0] * 0.0 + alphas[j, 1] * x + alphas[j, 2] * conv)
        mix = mix + betas[j] * mixed
    return jnp.maximum(mix, 0.0)


if __name__ == "__main__":
    key = jax.random.PRNGKey(0)
    n, c, h, w = 2, 32, 16, 16        # batch, channel, spatial (small)
    prev_part_num = 3                 # number of previous parts feeding the cell

    keys = jax.random.split(key, 2 * prev_part_num + 2)
    prevs = [jax.random.normal(keys[j], (n, c, h, w), dtype=jnp.float32)
             for j in range(prev_part_num)]
    conv_w = [0.1 * jax.random.normal(keys[prev_part_num + j], (c, c, 1, 1),
                                      dtype=jnp.float32)
              for j in range(prev_part_num)]
    alpha_weights = jax.random.normal(keys[-2], (prev_part_num, NUM_OPS),
                                      dtype=jnp.float32)
    beta_weights = jax.random.normal(keys[-1], (prev_part_num,), dtype=jnp.float32)

    out = gcell_forward(prevs, alpha_weights, beta_weights, conv_w)
    out = jax.block_until_ready(out)

    ref = gcell_reference(prevs, alpha_weights, beta_weights, conv_w)
    assert out.shape == (n, c, h, w)
    assert jnp.allclose(out, ref, atol=1e-4, rtol=1e-4), "mismatch vs reference"
    print("KERNEL_OK")
</pallas_src>

<mosaic_0001>
module attributes {stable_mosaic.version = 11 : i64} {
  func.func @_gcell_kernel(%arg0: i32, %arg1: i32, %arg2: memref<1x32x256xf32, #tpu.memory_space<vmem>>, %arg3: memref<1x32x256xf32, #tpu.memory_space<vmem>>, %arg4: memref<1x32x256xf32, #tpu.memory_space<vmem>>, %arg5: memref<3x32x32xf32, #tpu.memory_space<vmem>>, %arg6: memref<1x32x256xf32, #tpu.memory_space<vmem>>) attributes {dimension_semantics = [#tpu.dimension_semantics<parallel>, #tpu.dimension_semantics<parallel>], iteration_bounds = array<i64: 2, 1>, scalar_prefetch = 0 : i64, scratch_operands = 0 : i64, tpu.core_type = #tpu.core_type<tc>, window_params = [{transform_indices = @transform_0, window_bounds = array<i64: 1, 32, 256>}, {transform_indices = @transform_1, window_bounds = array<i64: 1, 32, 256>}, {transform_indices = @transform_2, window_bounds = array<i64: 1, 32, 256>}, {pipeline_mode = #tpu.pipeline_mode<synchronous>, transform_indices = @transform_3, window_bounds = array<i64: 3, 32, 32>}, {transform_indices = @transform_4, window_bounds = array<i64: 1, 32, 256>}]} {
    %c0 = arith.constant 0 : index
    %c0_0 = arith.constant 0 : index
    %c0_1 = arith.constant 0 : index
    %0 = vector.load %arg5[%c0, %c0_0, %c0_1] : memref<3x32x32xf32, #tpu.memory_space<vmem>>, vector<1x32x32xf32>
    %1 = vector.shape_cast %0 : vector<1x32x32xf32> to vector<32x32xf32>
    %c0_2 = arith.constant 0 : index
    %c0_3 = arith.constant 0 : index
    %c0_4 = arith.constant 0 : index
    %2 = vector.load %arg2[%c0_2, %c0_3, %c0_4] : memref<1x32x256xf32, #tpu.memory_space<vmem>>, vector<1x32x256xf32>
    %3 = vector.shape_cast %2 : vector<1x32x256xf32> to vector<32x256xf32>
    %cst = arith.constant dense<0.000000e+00> : vector<32x256xf32>
    %4 = tpu.matmul %1, %3, %cst {dimension_numbers = #tpu.dot_dimension_numbers<[1], [0], [0], [1], [0, 0, 1, 1], [], []>} : vector<32x32xf32>, vector<32x256xf32>, vector<32x256xf32> -> vector<32x256xf32>
    %c1 = arith.constant 1 : index
    %c0_5 = arith.constant 0 : index
    %c0_6 = arith.constant 0 : index
    %5 = vector.load %arg5[%c1, %c0_5, %c0_6] : memref<3x32x32xf32, #tpu.memory_space<vmem>>, vector<1x32x32xf32>
    %6 = vector.shape_cast %5 : vector<1x32x32xf32> to vector<32x32xf32>
    %c0_7 = arith.constant 0 : index
    %c0_8 = arith.constant 0 : index
    %c0_9 = arith.constant 0 : index
    %7 = vector.load %arg3[%c0_7, %c0_8, %c0_9] : memref<1x32x256xf32, #tpu.memory_space<vmem>>, vector<1x32x256xf32>
    %8 = vector.shape_cast %7 : vector<1x32x256xf32> to vector<32x256xf32>
    %cst_10 = arith.constant dense<0.000000e+00> : vector<32x256xf32>
    %9 = tpu.matmul %6, %8, %cst_10 {dimension_numbers = #tpu.dot_dimension_numbers<[1], [0], [0], [1], [0, 0, 1, 1], [], []>} : vector<32x32xf32>, vector<32x256xf32>, vector<32x256xf32> -> vector<32x256xf32>
    %10 = arith.addf %4, %9 : vector<32x256xf32>
    %c2 = arith.constant 2 : index
    %c0_11 = arith.constant 0 : index
    %c0_12 = arith.constant 0 : index
    %11 = vector.load %arg5[%c2, %c0_11, %c0_12] : memref<3x32x32xf32, #tpu.memory_space<vmem>>, vector<1x32x32xf32>
    %12 = vector.shape_cast %11 : vector<1x32x32xf32> to vector<32x32xf32>
    %c0_13 = arith.constant 0 : index
    %c0_14 = arith.constant 0 : index
    %c0_15 = arith.constant 0 : index
    %13 = vector.load %arg4[%c0_13, %c0_14, %c0_15] : memref<1x32x256xf32, #tpu.memory_space<vmem>>, vector<1x32x256xf32>
    %14 = vector.shape_cast %13 : vector<1x32x256xf32> to vector<32x256xf32>
    %cst_16 = arith.constant dense<0.000000e+00> : vector<32x256xf32>
    %15 = tpu.matmul %12, %14, %cst_16 {dimension_numbers = #tpu.dot_dimension_numbers<[1], [0], [0], [1], [0, 0, 1, 1], [], []>} : vector<32x32xf32>, vector<32x256xf32>, vector<32x256xf32> -> vector<32x256xf32>
    %16 = arith.addf %10, %15 : vector<32x256xf32>
    %cst_17 = arith.constant 0.000000e+00 : f32
    %17 = vector.broadcast %cst_17 : f32 to vector<32x256xf32>
    %18 = arith.maximumf %16, %17 : vector<32x256xf32>
    %c0_18 = arith.constant 0 : index
    %c0_19 = arith.constant 0 : index
    %c0_20 = arith.constant 0 : index
    %19 = vector.load %arg6[%c0_18, %c0_19, %c0_20] : memref<1x32x256xf32, #tpu.memory_space<vmem>>, vector<1x32x256xf32>
    %20 = vector.shape_cast %19 : vector<1x32x256xf32> to vector<32x256xf32>
    %21 = vector.shape_cast %18 : vector<32x256xf32> to vector<1x32x256xf32>
    tpu.vector_store %arg6[%c0_18, %c0_19, %c0_20], %21 {strides = array<i32>} : memref<1x32x256xf32, #tpu.memory_space<vmem>>, vector<1x32x256xf32>,
    return
  }
  func.func @transform_0(%arg0: i32, %arg1: i32) -> (i32, i32, i32) {
    %c0_i32 = arith.constant 0 : i32
    %c0_i32_0 = arith.constant 0 : i32
    return %arg0, %c0_i32, %arg1 : i32, i32, i32
  }
  func.func @transform_1(%arg0: i32, %arg1: i32) -> (i32, i32, i32) {
    %c0_i32 = arith.constant 0 : i32
    %c0_i32_0 = arith.constant 0 : i32
    return %arg0, %c0_i32, %arg1 : i32, i32, i32
  }
  func.func @transform_2(%arg0: i32, %arg1: i32) -> (i32, i32, i32) {
    %c0_i32 = arith.constant 0 : i32
    %c0_i32_0 = arith.constant 0 : i32
    return %arg0, %c0_i32, %arg1 : i32, i32, i32
  }
  func.func @transform_3(%arg0: i32, %arg1: i32) -> (i32, i32, i32) {
    %c0_i32 = arith.constant 0 : i32
    %c0_i32_0 = arith.constant 0 : i32
    %c0_i32_1 = arith.constant 0 : i32
    %c0_i32_2 = arith.constant 0 : i32
    return %c0_i32, %c0_i32_0, %c0_i32_1 : i32, i32, i32
  }
  func.func @transform_4(%arg0: i32, %arg1: i32) -> (i32, i32, i32) {
    %c0_i32 = arith.constant 0 : i32
    %c0_i32_0 = arith.constant 0 : i32
    return %arg0, %c0_i32, %arg1 : i32, i32, i32
  }
}

</mosaic_0001>

<llo_original>
// kernel: tpu_custom_call.1
$region0: #{tpu_custom_call.1}
  #allocation0 [shape = 'u32[]', space=smem, size = 0x4, offset = 0x4, fixed_abs, tag = 'smem constant byte address 0x4 - core index']
  #allocation1 [shape = 'u32[144,128]{1,0:T(1,128)}', space=vmem, size = 0x12000, scoped, tag = 'internal scratch']
  %s0 = inlined_call_operand.hbm [shape: f32[2,32,256], index: 0, kind: input, shape index: {}]
  %s1 = inlined_call_operand.hbm [shape: f32[2,32,256], index: 1, kind: input, shape index: {}]
  %s2 = inlined_call_operand.hbm [shape: f32[2,32,256], index: 2, kind: input, shape index: {}]
  %s3 = inlined_call_operand.hbm [shape: f32[3,32,32], index: 3, kind: input, shape index: {}]
  %s4 = inlined_call_operand.hbm [shape: f32[2,32,256], index: 4, kind: output, shape index: {}]
  %s5 = sld [smem:[#allocation0]]
  $region65: #{tpu_custom_call.1} parent=0
    _
  %s7 = ssub.s32 1, %s5
  %s8 = scalar_select 0, %s7, %s5
  $region1: #{tpu_custom_call.1} parent=0
    #allocation2 [shape = 'u8[65536]{0}', space=vmem, size = 0x10000, scoped, tag = 'input window, operand 0']
    #allocation3 [shape = 's32[2]{0}', space=sflag, size = 0x8, scoped, tag = 'scoped memory for tpu_custom_call.1']
    #allocation4 [shape = 's32[2]{0}', space=sflag, size = 0x8, scoped, tag = 'scoped memory for tpu_custom_call.1']
    #allocation5 [shape = 'u8[65536]{0}', space=vmem, size = 0x10000, scoped, tag = 'input window, operand 1']
    #allocation6 [shape = 's32[2]{0}', space=sflag, size = 0x8, scoped, tag = 'scoped memory for tpu_custom_call.1']
    #allocation7 [shape = 'u8[65536]{0}', space=vmem, size = 0x10000, scoped, tag = 'input window, operand 2']
    #allocation8 [shape = 'u8[49152]{0}', space=vmem, size = 0xc000, scoped, tag = 'input window, operand 3, single buffered']
    #allocation9 [shape = 's32[1]{0}', space=sflag, size = 0x4, scoped, tag = 'scoped memory for tpu_custom_call.1']
    #allocation10 [shape = 'u8[65536]{0}', space=vmem, size = 0x10000, scoped, tag = 'output window, operand 0']
    %9 = vsyncpa [#allocation3], 0
    %s10 = scalar_lea.sflag [#allocation3], 1
    %11 = vsyncpa %s10, 0
    %12 = vsyncpa [#allocation6], 0
    %s13 = scalar_lea.sflag [#allocation6], 1
    %14 = vsyncpa %s13, 0
    %15 = vsyncpa [#allocation9], 0
    %16 = vsyncpa [#allocation4], 0
    %s17 = scalar_lea.sflag [#allocation4], 1
    %18 = vsyncpa %s17, 0
    loop: start=0, step=1, limit=4
    $region2: #{tpu_custom_call.1} parent=1 // loop_pre_header
      _
    $region3: #{tpu_custom_call.1} parent=1 // loop_header
      %s20 = sphi 0, %s24
      %p21 = scmp.ge.s32.totalorder %s20, 4
      %s27 = sphi 0, %s39
      %s28 = sphi 0, %s35
      %s29 = sphi 0, %s27
      %s30 = sphi 0, %s28
      %s31 = sphi 0, %s29
      %s32 = sphi 0, %s30
      %s44 = sphi 0, %s46
      %s47 = sphi 0, %s44
      %s48 = sphi 0, %s47
      %s64 = sphi 0, %s48
      %s72 = sphi 0, %s74
      %s75 = sphi 0, %s72
      %s76 = sphi 0, %s75
      %s92 = sphi 0, %s76
      %s100 = sphi 0, %s102
      %s103 = sphi 0, %s100
      %s104 = sphi 0, %s103
      %s120 = sphi 0, %s104
      %s124 = sphi 0, %s124
      %s126 = sphi 0, %s124
      %s127 = sphi 0, %s126
      %s141 = sphi 0, %s127
      %s149 = sphi 0, %s151
      %s152 = sphi 0, %s149
      %s153 = sphi 0, %s152
      %s169 = sphi 0, %s153
    $region4: #{tpu_custom_call.1} parent=1 // loop_header_branch
      %23 = sbr.rel (%p21) target = $region8
    $region5: #{tpu_custom_call.1} parent=1 // loop_body
      %s25 = ssub.s32 %s20, 1
      %s26 = ssub.s32 %s20, 2
      %s33 = sadd.s32 1, %s28
      %p34 = scmp.ge.s32.totalorder %s33, 1
      %s35 = scalar_select %p34, 0, %s33
      %s36 = sadd.s32 1, %s27
      %s37 = scalar_select %p34, %s36, %s27
      %p38 = scmp.ge.s32.totalorder %s37, 2
      %s39 = scalar_select %p38, 0, %s37
      %s40 = ssub.s32 %s27, %s39
      %s41 = ssub.s32 %s28, %s35
      %s42 = sor.u32 %s40, %s41
      %p43 = scmp.eq.s32.totalorder %s42, 0
      %s45 = sadd.s32 %s44, 1
      %s46 = scalar_select %p43, %s44, %s45
      %p49 = pneg %p43
      %p50 = scmp.eq.s32.totalorder %s20, 1
      %p51 = por %p49, %p50
      %p52 = scmp.ne.s32.totalorder %s44, %s47
      %p53 = scmp.eq.s32.totalorder %s20, 0
      %p54 = por %p52, %p53
      %p55 = scmp.ne.s32.totalorder %s44, %s47
      %p56 = scmp.eq.s32.totalorder %s25, 1
      %p57 = por %p55, %p56
      %p58 = scmp.ne.s32.totalorder %s47, %s48
      %p59 = scmp.eq.s32.totalorder %s25, 0
      %p60 = por %p58, %p59
      %p61 = scmp.ne.s32.totalorder %s47, %s48
      %p62 = scmp.eq.s32.totalorder %s26, 1
      %p63 = por %p61, %p62
      %p65 = scmp.ne.s32.totalorder %s48, %s64
      %p66 = scmp.eq.s32.totalorder %s26, 0
      %p67 = por %p65, %p66
      %s68 = ssub.s32 %s27, %s39
      %s69 = ssub.s32 %s28, %s35
      %s70 = sor.u32 %s68, %s69
      %p71 = scmp.eq.s32.totalorder %s70, 0
      %s73 = sadd.s32 %s72, 1
      %s74 = scalar_select %p71, %s72, %s73
      %p77 = pneg %p71
      %p78 = scmp.eq.s32.totalorder %s20, 1
      %p79 = por %p77, %p78
      %p80 = scmp.ne.s32.totalorder %s72, %s75
      %p81 = scmp.eq.s32.totalorder %s20, 0
      %p82 = por %p80, %p81
      %p83 = scmp.ne.s32.totalorder %s72, %s75
      %p84 = scmp.eq.s32.totalorder %s25, 1
      %p85 = por %p83, %p84
      %p86 = scmp.ne.s32.totalorder %s75, %s76
      %p87 = scmp.eq.s32.totalorder %s25, 0
      %p88 = por %p86, %p87
      %p89 = scmp.ne.s32.totalorder %s75, %s76
      %p90 = scmp.eq.s32.totalorder %s26, 1
      %p91 = por %p89, %p90
      %p93 = scmp.ne.s32.totalorder %s76, %s92
      %p94 = scmp.eq.s32.totalorder %s26, 0
      %p95 = por %p93, %p94
      %s96 = ssub.s32 %s27, %s39
      %s97 = ssub.s32 %s28, %s35
      %s98 = sor.u32 %s96, %s97
      %p99 = scmp.eq.s32.totalorder %s98, 0
      %s101 = sadd.s32 %s100, 1
      %s102 = scalar_select %p99, %s100, %s101
      %p105 = pneg %p99
      %p106 = scmp.eq.s32.totalorder %s20, 1
      %p107 = por %p105, %p106
      %p108 = scmp.ne.s32.totalorder %s100, %s103
      %p109 = scmp.eq.s32.totalorder %s20, 0
      %p110 = por %p108, %p109
      %p111 = scmp.ne.s32.totalorder %s100, %s103
      %p112 = scmp.eq.s32.totalorder %s25, 1
      %p113 = por %p111, %p112
      %p114 = scmp.ne.s32.totalorder %s103, %s104
      %p115 = scmp.eq.s32.totalorder %s25, 0
      %p116 = por %p114, %p115
      %p117 = scmp.ne.s32.totalorder %s103, %s104
      %p118 = scmp.eq.s32.totalorder %s26, 1
      %p119 = por %p117, %p118
      %p121 = scmp.ne.s32.totalorder %s104, %s120
      %p122 = scmp.eq.s32.totalorder %s26, 0
      %p123 = por %p121, %p122
      %s125 = sadd.s32 %s124, 1
      %p128 = scmp.eq.s32.totalorder %s20, 1
      %p129 = scmp.ne.s32.totalorder %s124, %s126
      %p130 = scmp.eq.s32.totalorder %s20, 0
      %p131 = por %p129, %p130
      %p132 = scmp.ne.s32.totalorder %s124, %s126
      %p133 = scmp.eq.s32.totalorder %s25, 1
      %p134 = por %p132, %p133
      %p135 = scmp.ne.s32.totalorder %s126, %s127
      %p136 = scmp.eq.s32.totalorder %s25, 0
      %p137 = por %p135, %p136
      %p138 = scmp.ne.s32.totalorder %s126, %s127
      %p139 = scmp.eq.s32.totalorder %s26, 1
      %p140 = por %p138, %p139
      %p142 = scmp.ne.s32.totalorder %s127, %s141
      %p143 = scmp.eq.s32.totalorder %s26, 0
      %p144 = por %p142, %p143
      %s145 = ssub.s32 %s27, %s39
      %s146 = ssub.s32 %s28, %s35
      %s147 = sor.u32 %s145, %s146
      %p148 = scmp.eq.s32.totalorder %s147, 0
      %s150 = sadd.s32 %s149, 1
      %s151 = scalar_select %p148, %s149, %s150
      %p154 = pneg %p148
      %p155 = scmp.eq.s32.totalorder %s20, 1
      %p156 = por %p154, %p155
      %p157 = scmp.ne.s32.totalorder %s149, %s152
      %p158 = scmp.eq.s32.totalorder %s20, 0
      %p159 = por %p157, %p158
      %p160 = scmp.ne.s32.totalorder %s149, %s152
      %p161 = scmp.eq.s32.totalorder %s25, 1
      %p162 = por %p160, %p161
      %p163 = scmp.ne.s32.totalorder %s152, %s153
      %p164 = scmp.eq.s32.totalorder %s25, 0
      %p165 = por %p163, %p164
      %p166 = scmp.ne.s32.totalorder %s152, %s153
      %p167 = scmp.eq.s32.totalorder %s26, 1
      %p168 = por %p166, %p167
      %p170 = scmp.ne.s32.totalorder %s153, %s169
      %p171 = scmp.eq.s32.totalorder %s26, 0
      %p172 = por %p170, %p171
      %p173 = scmp.le.s32.totalorder 1, %s20
      %p174 = scmp.lt.s32.totalorder %s20, 3
      %p175 = pnand %p173, %p174
      %p176 = pneg %p175
      // Predicated region
      $region9: #{tpu_custom_call.1} parent=5 // pred_check
        _
      $region10: #{tpu_custom_call.1} parent=5 // pred_check_branch
        %178 = sbr.rel (%p175) target = $region12
      $region11: #{tpu_custom_call.1} parent=5 // pred_region
        %s179 = ssub.s32 %s20, 1
        // Predicated region
        $region13: #{tpu_custom_call.1} parent=11 // pred_check
          %p180 = pneg %p137
        $region14: #{tpu_custom_call.1} parent=11 // pred_check_branch
          %182 = sbr.rel (%p180) target = $region16
        $region15: #{tpu_custom_call.1} parent=11 // pred_region
          %s184 = ssub.s32 1536, 1536
          %185 = vsyncadd [#allocation9], %s184
          %s186 = sshll.u32 [#allocation8], 4
          %s187 = int_to_ptr.vmem [resolvable:$true] %s186
          %192 = dma.hbm_to_vmem [thread:$0]  %s3, 1536, %s187, [#allocation9], 128, 128, 8
        $region16: #{tpu_custom_call.1} parent=11 // pred_fallthru
          _
      $region12: #{tpu_custom_call.1} parent=5 // pred_fallthru
        _
      %p193 = scmp.lt.s32.totalorder %s20, 2
      // Predicated region
      $region17: #{tpu_custom_call.1} parent=5 // pred_check
        %p194 = pneg %p193
      $region18: #{tpu_custom_call.1} parent=5 // pred_check_branch
        %196 = sbr.rel (%p194) target = $region20
      $region19: #{tpu_custom_call.1} parent=5 // pred_region
        // Predicated region
        $region21: #{tpu_custom_call.1} parent=19 // pred_check
          %p197 = pneg %p54
        $region22: #{tpu_custom_call.1} parent=19 // pred_check_branch
          %199 = sbr.rel (%p197) target = $region24
        $region23: #{tpu_custom_call.1} parent=19 // pred_region
          %s200 = sand.u32 %s44, 1
          %s201 = scalar_lea.sflag [#allocation3], %s200
          %s202 = sand.u32 %s44, 1
          %s203 = smul.addr %s202, 64
          %s204 = scalar_lea.vmem [#allocation2], %s203
          %s205 = smul.u32 2, %s28
          %s207 = ssub.s32 1024, 1024
          %208 = vsyncadd %s201, %s207
          %s209 = smul.addr %s27, 8
          %s210 = sadd.s32 %s205, %s209
          %s211 = smul.addr %s210, 128
          %s212 = scalar_lea.hbm %s0, %s211
          %s213 = sshll.u32 %s204, 4
          %s214 = int_to_ptr.vmem [resolvable:$true] %s213
          %219 = dma.hbm_to_vmem [thread:$0]  %s212, 1024, %s214, %s201, 256, 256, 16
        $region24: #{tpu_custom_call.1} parent=19 // pred_fallthru
          _
        // Predicated region
        $region25: #{tpu_custom_call.1} parent=19 // pred_check
          %p220 = pneg %p82
        $region26: #{tpu_custom_call.1} parent=19 // pred_check_branch
          %222 = sbr.rel (%p220) target = $region28
        $region27: #{tpu_custom_call.1} parent=19 // pred_region
          %s223 = sand.u32 %s20, 1
          %s224 = scalar_lea.sflag [#allocation6], %s223
          %s225 = sand.u32 %s72, 1
          %s226 = smul.addr %s225, 64
          %s227 = scalar_lea.vmem [#allocation5], %s226
          %s228 = smul.u32 2, %s28
          %s230 = ssub.s32 1024, 1024
          %231 = vsyncadd %s224, %s230
          %s232 = smul.addr %s27, 8
          %s233 = sadd.s32 %s228, %s232
          %s234 = smul.addr %s233, 128
          %s235 = scalar_lea.hbm %s1, %s234
          %s236 = sshll.u32 %s227, 4
          %s237 = int_to_ptr.vmem [resolvable:$true] %s236
          %242 = dma.hbm_to_vmem [thread:$0]  %s235, 1024, %s237, %s224, 256, 256, 16
        $region28: #{tpu_custom_call.1} parent=19 // pred_fallthru
          _
        // Predicated region
        $region29: #{tpu_custom_call.1} parent=19 // pred_check
          %p243 = pneg %p110
        $region30: #{tpu_custom_call.1} parent=19 // pred_check_branch
          %245 = sbr.rel (%p243) target = $region32
        $region31: #{tpu_custom_call.1} parent=19 // pred_region
          %s246 = sand.u32 %s20, 1
          %s247 = scalar_lea.sflag [#allocation6], %s246
          %s248 = sand.u32 %s100, 1
          %s249 = smul.addr %s248, 64
          %s250 = scalar_lea.vmem [#allocation7], %s249
          %s251 = smul.u32 2, %s28
          %s253 = ssub.s32 1024, 1024
          %254 = vsyncadd %s247, %s253
          %s255 = smul.addr %s27, 8
          %s256 = sadd.s32 %s251, %s255
          %s257 = smul.addr %s256, 128
          %s258 = scalar_lea.hbm %s2, %s257
          %s259 = sshll.u32 %s250, 4
          %s260 = int_to_ptr.vmem [resolvable:$true] %s259
          %265 = dma.hbm_to_vmem [thread:$0]  %s258, 1024, %s260, %s247, 256, 256, 16
        $region32: #{tpu_custom_call.1} parent=19 // pred_fallthru
          _
      $region20: #{tpu_custom_call.1} parent=5 // pred_fallthru
        _
      %p266 = scmp.le.s32.totalorder 1, %s20
      %p267 = scmp.lt.s32.totalorder %s20, 3
      %p268 = pnand %p266, %p267
      %p269 = pneg %p268
      // Predicated region
      $region33: #{tpu_custom_call.1} parent=5 // pred_check
        _
      $region34: #{tpu_custom_call.1} parent=5 // pred_check_branch
        %271 = sbr.rel (%p268) target = $region36
      $region35: #{tpu_custom_call.1} parent=5 // pred_region
        %s272 = ssub.s32 %s20, 1
        %s273 = sand.u32 %s47, 1
        %s274 = scalar_lea.sflag [#allocation3], %s273
        %s275 = sand.u32 %s47, 1
        %s276 = smul.addr %s275, 64
        %s277 = scalar_lea.vmem [#allocation2], %s276
        // Predicated region
        $region37: #{tpu_custom_call.1} parent=35 // pred_check
          %p278 = pneg %p60
        $region38: #{tpu_custom_call.1} parent=35 // pred_check_branch
          %280 = sbr.rel (%p278) target = $region40
        $region39: #{tpu_custom_call.1} parent=35 // pred_region
          %281 = dma.done %s274, 1024
        $region40: #{tpu_custom_call.1} parent=35 // pred_fallthru
          _
        %s282 = sand.u32 %s25, 1
        %s283 = scalar_lea.sflag [#allocation6], %s282
        %s284 = sand.u32 %s75, 1
        %s285 = smul.addr %s284, 64
        %s286 = scalar_lea.vmem [#allocation5], %s285
        // Predicated region
        $region41: #{tpu_custom_call.1} parent=35 // pred_check
          %p287 = pneg %p88
        $region42: #{tpu_custom_call.1} parent=35 // pred_check_branch
          %289 = sbr.rel (%p287) target = $region44
        $region43: #{tpu_custom_call.1} parent=35 // pred_region
          %290 = dma.done %s283, 1024
        $region44: #{tpu_custom_call.1} parent=35 // pred_fallthru
          _
        %s291 = sand.u32 %s25, 1
        %s292 = scalar_lea.sflag [#allocation6], %s291
        %s293 = sand.u32 %s103, 1
        %s294 = smul.addr %s293, 64
        %s295 = scalar_lea.vmem [#allocation7], %s294
        // Predicated region
        $region45: #{tpu_custom_call.1} parent=35 // pred_check
          %p296 = pneg %p116
        $region46: #{tpu_custom_call.1} parent=35 // pred_check_branch
          %298 = sbr.rel (%p296) target = $region48
        $region47: #{tpu_custom_call.1} parent=35 // pred_region
          %299 = dma.done %s292, 1024
        $region48: #{tpu_custom_call.1} parent=35 // pred_fallthru
          _
        // Predicated region
        $region49: #{tpu_custom_call.1} parent=35 // pred_check
          %p300 = pneg %p137
        $region50: #{tpu_custom_call.1} parent=35 // pred_check_branch
          %302 = sbr.rel (%p300) target = $region52
        $region51: #{tpu_custom_call.1} parent=35 // pred_region
          %303 = dma.done [#allocation9], 1536
        $region52: #{tpu_custom_call.1} parent=35 // pred_fallthru
          _
        %s304 = sand.u32 %s47, 1
        %s305 = scalar_lea.sflag [#allocation3], %s304
        %s306 = sand.u32 %s47, 1
        %s307 = smul.addr %s306, 64
        %s308 = scalar_lea.vmem [#allocation2], %s307
        %p309 = pneg %p60
        %p310 = pneg %p57
        %s311 = sand.u32 %s25, 1
        %s312 = scalar_lea.sflag [#allocation6], %s311
        %s313 = sand.u32 %s75, 1
        %s314 = smul.addr %s313, 64
        %s315 = scalar_lea.vmem [#allocation5], %s314
        %p316 = pneg %p88
        %p317 = pneg %p85
        %s318 = sand.u32 %s25, 1
        %s319 = scalar_lea.sflag [#allocation6], %s318
        %s320 = sand.u32 %s103, 1
        %s321 = smul.addr %s320, 64
        %s322 = scalar_lea.vmem [#allocation7], %s321
        %p323 = pneg %p116
        %p324 = pneg %p113
        %p325 = pneg %p137
        %p326 = pneg %p134
        %p327 = pneg %p165
        %p328 = pneg %p162
        %s329 = sand.u32 %s152, 1
        %s330 = scalar_lea.sflag [#allocation4], %s329
        %s331 = sand.u32 %s152, 1
        %s332 = smul.addr %s331, 64
        %s333 = scalar_lea.vmem [#allocation10], %s332
        %s334 = smul.u32 2, %s30
        %s335 = smul.u32 2, %s30
        %s336 = smul.u32 2, %s30
        %s337 = smul.u32 2, %s30
        %v338 = vld [vmem:[#allocation8] sm:$0xff]
        %v339 = vld [vmem:[#allocation8 + $0x8] sm:$0xff]
        %v340 = vld [vmem:[#allocation8 + $0x10] sm:$0xff]
        %v341 = vld [vmem:[#allocation8 + $0x18] sm:$0xff]
        %v342 = vld [vmem:[%s277] sm:$0xff]
        %v343 = vld [vmem:[%s277 + $0x8] sm:$0xff]
        %v344 = vld [vmem:[%s277 + $0x10] sm:$0xff]
        %v345 = vld [vmem:[%s277 + $0x18] sm:$0xff]
        %v346 = vld [vmem:[%s277 + $0x20] sm:$0xff]
        %v347 = vld [vmem:[%s277 + $0x28] sm:$0xff]
        %v348 = vld [vmem:[%s277 + $0x30] sm:$0xff]
        %v349 = vld [vmem:[%s277 + $0x38] sm:$0xff]
        %s350 = scalar_lea.vmem [#allocation8], 32
        %v351 = vld [vmem:[%s350] sm:$0xff]
        %v352 = vld [vmem:[%s350 + $0x8] sm:$0xff]
        %v353 = vld [vmem:[%s350 + $0x10] sm:$0xff]
        %v354 = vld [vmem:[%s350 + $0x18] sm:$0xff]
        %v355 = vld [vmem:[%s286] sm:$0xff]
        %v356 = vld [vmem:[%s286 + $0x8] sm:$0xff]
        %v357 = vld [vmem:[%s286 + $0x10] sm:$0xff]
        %v358 = vld [vmem:[%s286 + $0x18] sm:$0xff]
        %v359 = vld [vmem:[%s286 + $0x20] sm:$0xff]
        %v360 = vld [vmem:[%s286 + $0x28] sm:$0xff]
        %v361 = vld [vmem:[%s286 + $0x30] sm:$0xff]
        %v362 = vld [vmem:[%s286 + $0x38] sm:$0xff]
        %vm363 = vcmask 261120
        %v365 = vsel %vm363, %v351, 0
        %v368 = vsel %vm363, %v352, 0
        %v371 = vsel %vm363, %v353, 0
        %v374 = vsel %vm363, %v354, 0
        %376 = vmatprep.subr.mxu0 %v356
        %377 = vmatpush1.msra.mxu0 %v355
        %378 = vmatprep.subr.mxu0 %v358
        %379 = vmatpush1.msra.mxu0 %v357
        %380 = vmatprep.subr.mxu0 %v360
        %381 = vmatpush1.msra.mxu0 %v359
        %382 = vmatprep.subr.mxu0 %v362
        %383 = vmatpush1.msra.mxu0 %v361
        %384 = vmatprep.subr.mxu0 0.0
        %385 = vmatpush1.msra.mxu0 0.0
        %386 = vmatprep.subr.mxu0 0.0
        %387 = vmatpush1.msra.mxu0 0.0
        %388 = vmatprep.subr.mxu0 0.0
        %389 = vmatpush1.msra.mxu0 0.0
        %390 = vmatprep.subr.mxu0 0.0
        %391 = vmatpush1.msra.mxu0 0.0
        %392 = vmatprep.subr.mxu0 0.0
        %393 = vmatpush1.msra.mxu0 0.0
        %394 = vmatprep.subr.mxu0 0.0
        %395 = vmatpush1.msra.mxu0 0.0
        %396 = vmatprep.subr.mxu0 0.0
        %397 = vmatpush1.msra.mxu0 0.0
        %398 = vmatprep.subr.mxu0 0.0
        %399 = vmatpush1.msra.mxu0 0.0
        %400 = vmatprep.subr.mxu0 0.0
        %401 = vmatpush1.msra.mxu0 0.0
        %402 = vmatprep.subr.mxu0 0.0
        %403 = vmatpush1.msra.mxu0 0.0
        %404 = vmatprep.subr.mxu0 0.0
        %405 = vmatpush1.msra.mxu0 0.0
        %406 = vmatprep.subr.mxu0 0.0
        %407 = vmatpush1.msra.mxu0 0.0
        %408 = vmatprep.subr.mxu0 0.0
        %409 = vmatpush1.msra.mxu0 0.0
        %410 = vmatprep.subr.mxu0 0.0
        %411 = vmatpush1.msra.mxu0 0.0
        %412 = vmatprep.subr.mxu0 0.0
        %413 = vmatpush1.msra.mxu0 0.0
        %414 = vmatprep.subr.mxu0 0.0
        %415 = vmatpush1.msra.mxu0 0.0
        %416 = vmatprep.subr.mxu0 0.0
        %417 = vmatpush1.msra.mxu0 0.0
        %418 = vmatprep.subr.mxu0 0.0
        %419 = vmatpush1.msra.mxu0 0.0
        %420 = vmatprep.subr.mxu0 0.0
        %421 = vmatpush1.msra.mxu0 0.0
        %422 = vmatprep.subr.mxu0 0.0
        %423 = vmatpush1.msra.mxu0 0.0
        %424 = vmatprep.subr.mxu0 0.0
        %425 = vmatpush1.msra.mxu0 0.0
        %426 = vmatprep.subr.mxu0 0.0
        %427 = vmatpush1.msra.mxu0 0.0
        %428 = vmatprep.subr.mxu0 0.0
        %429 = vmatpush1.msra.mxu0 0.0
        %430 = vmatprep.subr.mxu0 0.0
        %431 = vmatpush1.msra.mxu0 0.0
        %432 = vmatprep.subr.mxu0 0.0
        %433 = vmatpush1.msra.mxu0 0.0
        %434 = vmatprep.subr.mxu0 0.0
        %435 = vmatpush1.msra.mxu0 0.0
        %436 = vmatprep.subr.mxu0 0.0
        %437 = vmatpush1.msra.mxu0 0.0
        %438 = vmatprep.subr.mxu0 0.0
        %439 = vmatpush1.msra.mxu0 0.0
        %440 = vmatprep.mubr.f32.mxu0 0.0
        %441 = vmatmul.mubr.f32.gmra.mrb[0].mxu0 %v365
        %v442 = vpop.f32.mrb[0].mxu0
        %v443 = vadd.f32 0.0, %v442
        %v444 = vpop.f32.mrb[0].mxu0
        %v445 = vadd.f32 0.0, %v444
        %446 = vmatprep.mubr.f32.mxu0 0.0
        %447 = vmatmul.mubr.f32.gmra.mrb[0].mxu0 %v368
        %v448 = vpop.f32.mrb[0].mxu0
        %v449 = vadd.f32 0.0, %v448
        %v450 = vpop.f32.mrb[0].mxu0
        %v451 = vadd.f32 0.0, %v450
        %452 = vmatprep.mubr.f32.mxu0 0.0
        %453 = vmatmul.mubr.f32.gmra.mrb[0].mxu0 %v371
        %v454 = vpop.f32.mrb[0].mxu0
        %v455 = vadd.f32 0.0, %v454
        %v456 = vpop.f32.mrb[0].mxu0
        %v457 = vadd.f32 0.0, %v456
        %458 = vmatprep.mubr.f32.mxu0 0.0
        %459 = vmatmul.mubr.f32.gmra.mrb[0].mxu0 %v374
        %v460 = vpop.f32.mrb[0].mxu0
        %v461 = vadd.f32 0.0, %v460
        %v462 = vpop.f32.mrb[0].mxu0
        %v463 = vadd.f32 0.0, %v462
        %464 = vdwg.mxu0
        %v466 = vsel %vm363, %v338, 0
        %v469 = vsel %vm363, %v339, 0
        %v472 = vsel %vm363, %v340, 0
        %v475 = vsel %vm363, %v341, 0
        %477 = vmatprep.subr.mxu0 %v343
        %478 = vmatpush1.msra.mxu0 %v342
        %479 = vmatprep.subr.mxu0 %v345
        %480 = vmatpush1.msra.mxu0 %v344
        %481 = vmatprep.subr.mxu0 %v347
        %482 = vmatpush1.msra.mxu0 %v346
        %483 = vmatprep.subr.mxu0 %v349
        %484 = vmatpush1.msra.mxu0 %v348
        %485 = vmatprep.subr.mxu0 0.0
        %486 = vmatpush1.msra.mxu0 0.0
        %487 = vmatprep.subr.mxu0 0.0
        %488 = vmatpush1.msra.mxu0 0.0
        %489 = vmatprep.subr.mxu0 0.0
        %490 = vmatpush1.msra.mxu0 0.0
        %491 = vmatprep.subr.mxu0 0.0
        %492 = vmatpush1.msra.mxu0 0.0
        %493 = vmatprep.subr.mxu0 0.0
        %494 = vmatpush1.msra.mxu0 0.0
        %495 = vmatprep.subr.mxu0 0.0
        %496 = vmatpush1.msra.mxu0 0.0
        %497 = vmatprep.subr.mxu0 0.0
        %498 = vmatpush1.msra.mxu0 0.0
        %499 = vmatprep.subr.mxu0 0.0
        %500 = vmatpush1.msra.mxu0 0.0
        %501 = vmatprep.subr.mxu0 0.0
        %502 = vmatpush1.msra.mxu0 0.0
        %503 = vmatprep.subr.mxu0 0.0
        %504 = vmatpush1.msra.mxu0 0.0
        %505 = vmatprep.subr.mxu0 0.0
        %506 = vmatpush1.msra.mxu0 0.0
        %507 = vmatprep.subr.mxu0 0.0
        %508 = vmatpush1.msra.mxu0 0.0
        %509 = vmatprep.subr.mxu0 0.0
        %510 = vmatpush1.msra.mxu0 0.0
        %511 = vmatprep.subr.mxu0 0.0
        %512 = vmatpush1.msra.mxu0 0.0
        %513 = vmatprep.subr.mxu0 0.0
        %514 = vmatpush1.msra.mxu0 0.0
        %515 = vmatprep.subr.mxu0 0.0
        %516 = vmatpush1.msra.mxu0 0.0
        %517 = vmatprep.subr.mxu0 0.0
        %518 = vmatpush1.msra.mxu0 0.0
        %519 = vmatprep.subr.mxu0 0.0
        %520 = vmatpush1.msra.mxu0 0.0
        %521 = vmatprep.subr.mxu0 0.0
        %522 = vmatpush1.msra.mxu0 0.0
        %523 = vmatprep.subr.mxu0 0.0
        %524 = vmatpush1.msra.mxu0 0.0
        %525 = vmatprep.subr.mxu0 0.0
        %526 = vmatpush1.msra.mxu0 0.0
        %527 = vmatprep.subr.mxu0 0.0
        %528 = vmatpush1.msra.mxu0 0.0
        %529 = vmatprep.subr.mxu0 0.0
        %530 = vmatpush1.msra.mxu0 0.0
        %531 = vmatprep.subr.mxu0 0.0
        %532 = vmatpush1.msra.mxu0 0.0
        %533 = vmatprep.subr.mxu0 0.0
        %534 = vmatpush1.msra.mxu0 0.0
        %535 = vmatprep.subr.mxu0 0.0
        %536 = vmatpush1.msra.mxu0 0.0
        %537 = vmatprep.subr.mxu0 0.0
        %538 = vmatpush1.msra.mxu0 0.0
        %539 = vmatprep.subr.mxu0 0.0
        %540 = vmatpush1.msra.mxu0 0.0
        %541 = vmatprep.mubr.f32.mxu0 0.0
        %542 = vmatmul.mubr.f32.gmra.mrb[0].mxu0 %v466
        %v543 = vpop.f32.mrb[0].mxu0
        %v544 = vadd.f32 %v443, %v543
        %v545 = vpop.f32.mrb[0].mxu0
        %v546 = vadd.f32 %v445, %v545
        %547 = vmatprep.mubr.f32.mxu0 0.0
        %548 = vmatmul.mubr.f32.gmra.mrb[0].mxu0 %v469
        %v549 = vpop.f32.mrb[0].mxu0
        %v550 = vadd.f32 %v449, %v549
        %v551 = vpop.f32.mrb[0].mxu0
        %v552 = vadd.f32 %v451, %v551
        %553 = vmatprep.mubr.f32.mxu0 0.0
        %554 = vmatmul.mubr.f32.gmra.mrb[0].mxu0 %v472
        %v555 = vpop.f32.mrb[0].mxu0
        %v556 = vadd.f32 %v455, %v555
        %v557 = vpop.f32.mrb[0].mxu0
        %v558 = vadd.f32 %v457, %v557
        %559 = vmatprep.mubr.f32.mxu0 0.0
        %560 = vmatmul.mubr.f32.gmra.mrb[0].mxu0 %v475
        %v561 = vpop.f32.mrb[0].mxu0
        %v562 = vadd.f32 %v461, %v561
        %v563 = vpop.f32.mrb[0].mxu0
        %v564 = vadd.f32 %v463, %v563
        %565 = vdwg.mxu0
        %s566 = scalar_lea.vmem [#allocation8], 64
        %v567 = vld [vmem:[%s566] sm:$0xff]
        %v568 = vld [vmem:[%s566 + $0x8] sm:$0xff]
        %v569 = vld [vmem:[%s566 + $0x10] sm:$0xff]
        %v570 = vld [vmem:[%s566 + $0x18] sm:$0xff]
        %v571 = vld [vmem:[%s295] sm:$0xff]
        %v572 = vld [vmem:[%s295 + $0x8] sm:$0xff]
        %v573 = vld [vmem:[%s295 + $0x10] sm:$0xff]
        %v574 = vld [vmem:[%s295 + $0x18] sm:$0xff]
        %v575 = vld [vmem:[%s295 + $0x20] sm:$0xff]
        %v576 = vld [vmem:[%s295 + $0x28] sm:$0xff]
        %v577 = vld [vmem:[%s295 + $0x30] sm:$0xff]
        %v578 = vld [vmem:[%s295 + $0x38] sm:$0xff]
        %v580 = vsel %vm363, %v567, 0
        %v583 = vsel %vm363, %v568, 0
        %v586 = vsel %vm363, %v569, 0
        %v589 = vsel %vm363, %v570, 0
        %591 = vmatprep.subr.mxu0 %v572
        %592 = vmatpush1.msra.mxu0 %v571
        %593 = vmatprep.subr.mxu0 %v574
        %594 = vmatpush1.msra.mxu0 %v573
        %595 = vmatprep.subr.mxu0 %v576
        %596 = vmatpush1.msra.mxu0 %v575
        %597 = vmatprep.subr.mxu0 %v578
        %598 = vmatpush1.msra.mxu0 %v577
        %599 = vmatprep.subr.mxu0 0.0
        %600 = vmatpush1.msra.mxu0 0.0
        %601 = vmatprep.subr.mxu0 0.0
        %602 = vmatpush1.msra.mxu0 0.0
        %603 = vmatprep.subr.mxu0 0.0
        %604 = vmatpush1.msra.mxu0 0.0
        %605 = vmatprep.subr.mxu0 0.0
        %606 = vmatpush1.msra.mxu0 0.0
        %607 = vmatprep.subr.mxu0 0.0
        %608 = vmatpush1.msra.mxu0 0.0
        %609 = vmatprep.subr.mxu0 0.0
        %610 = vmatpush1.msra.mxu0 0.0
        %611 = vmatprep.subr.mxu0 0.0
        %612 = vmatpush1.msra.mxu0 0.0
        %613 = vmatprep.subr.mxu0 0.0
        %614 = vmatpush1.msra.mxu0 0.0
        %615 = vmatprep.subr.mxu0 0.0
        %616 = vmatpush1.msra.mxu0 0.0
        %617 = vmatprep.subr.mxu0 0.0
        %618 = vmatpush1.msra.mxu0 0.0
        %619 = vmatprep.subr.mxu0 0.0
        %620 = vmatpush1.msra.mxu0 0.0
        %621 = vmatprep.subr.mxu0 0.0
        %622 = vmatpush1.msra.mxu0 0.0
        %623 = vmatprep.subr.mxu0 0.0
        %624 = vmatpush1.msra.mxu0 0.0
        %625 = vmatprep.subr.mxu0 0.0
        %626 = vmatpush1.msra.mxu0 0.0
        %627 = vmatprep.subr.mxu0 0.0
        %628 = vmatpush1.msra.mxu0 0.0
        %629 = vmatprep.subr.mxu0 0.0
        %630 = vmatpush1.msra.mxu0 0.0
        %631 = vmatprep.subr.mxu0 0.0
        %632 = vmatpush1.msra.mxu0 0.0
        %633 = vmatprep.subr.mxu0 0.0
        %634 = vmatpush1.msra.mxu0 0.0
        %635 = vmatprep.subr.mxu0 0.0
        %636 = vmatpush1.msra.mxu0 0.0
        %637 = vmatprep.subr.mxu0 0.0
        %638 = vmatpush1.msra.mxu0 0.0
        %639 = vmatprep.subr.mxu0 0.0
        %640 = vmatpush1.msra.mxu0 0.0
        %641 = vmatprep.subr.mxu0 0.0
        %642 = vmatpush1.msra.mxu0 0.0
        %643 = vmatprep.subr.mxu0 0.0
        %644 = vmatpush1.msra.mxu0 0.0
        %645 = vmatprep.subr.mxu0 0.0
        %646 = vmatpush1.msra.mxu0 0.0
        %647 = vmatprep.subr.mxu0 0.0
        %648 = vmatpush1.msra.mxu0 0.0
        %649 = vmatprep.subr.mxu0 0.0
        %650 = vmatpush1.msra.mxu0 0.0
        %651 = vmatprep.subr.mxu0 0.0
        %652 = vmatpush1.msra.mxu0 0.0
        %653 = vmatprep.subr.mxu0 0.0
        %654 = vmatpush1.msra.mxu0 0.0
        %655 = vmatprep.mubr.f32.mxu0 0.0
        %656 = vmatmul.mubr.f32.gmra.mrb[0].mxu0 %v580
        %v657 = vpop.f32.mrb[0].mxu0
        %v658 = vadd.f32 0.0, %v657
        %v659 = vpop.f32.mrb[0].mxu0
        %v660 = vadd.f32 0.0, %v659
        %661 = vmatprep.mubr.f32.mxu0 0.0
        %662 = vmatmul.mubr.f32.gmra.mrb[0].mxu0 %v583
        %v663 = vpop.f32.mrb[0].mxu0
        %v664 = vadd.f32 0.0, %v663
        %v665 = vpop.f32.mrb[0].mxu0
        %v666 = vadd.f32 0.0, %v665
        %667 = vmatprep.mubr.f32.mxu0 0.0
        %668 = vmatmul.mubr.f32.gmra.mrb[0].mxu0 %v586
        %v669 = vpop.f32.mrb[0].mxu0
        %v670 = vadd.f32 0.0, %v669
        %v671 = vpop.f32.mrb[0].mxu0
        %v672 = vadd.f32 0.0, %v671
        %673 = vmatprep.mubr.f32.mxu0 0.0
        %674 = vmatmul.mubr.f32.gmra.mrb[0].mxu0 %v589
        %v675 = vpop.f32.mrb[0].mxu0
        %v676 = vadd.f32 0.0, %v675
        %v677 = vpop.f32.mrb[0].mxu0
        %v678 = vadd.f32 0.0, %v677
        %679 = vdwg.mxu0
        %v680 = vadd.f32 %v544, %v658
        %v681 = vadd.f32 %v546, %v660
        %v682 = vadd.f32 %v550, %v664
        %v683 = vadd.f32 %v552, %v666
        %v684 = vadd.f32 %v556, %v670
        %v685 = vadd.f32 %v558, %v672
        %v686 = vadd.f32 %v562, %v676
        %v687 = vadd.f32 %v564, %v678
        %v688 = vmax.f32 %v680, 0.0
        %v689 = vmax.f32 %v681, 0.0
        %v690 = vmax.f32 %v682, 0.0
        %v691 = vmax.f32 %v683, 0.0
        %v692 = vmax.f32 %v684, 0.0
        %v693 = vmax.f32 %v685, 0.0
        %v694 = vmax.f32 %v686, 0.0
        %v695 = vmax.f32 %v687, 0.0
        %696 = vst [vmem:[%s333] sm:$0xff] %v688
        %697 = vst [vmem:[%s333 + $0x8] sm:$0xff] %v689
        %698 = vst [vmem:[%s333 + $0x10] sm:$0xff] %v690
        %699 = vst [vmem:[%s333 + $0x18] sm:$0xff] %v691
        %700 = vst [vmem:[%s333 + $0x20] sm:$0xff] %v692
        %701 = vst [vmem:[%s333 + $0x28] sm:$0xff] %v693
        %702 = vst [vmem:[%s333 + $0x30] sm:$0xff] %v694
        %703 = vst [vmem:[%s333 + $0x38] sm:$0xff] %v695
        %s704 = sand.u32 %s152, 1
        %s705 = scalar_lea.sflag [#allocation4], %s704
        %s706 = sand.u32 %s152, 1
        %s707 = smul.addr %s706, 64
        %s708 = scalar_lea.vmem [#allocation10], %s707
        // Predicated region
        $region53: #{tpu_custom_call.1} parent=35 // pred_check
          %p709 = pneg %p162
        $region54: #{tpu_custom_call.1} parent=35 // pred_check_branch
          %711 = sbr.rel (%p709) target = $region56
        $region55: #{tpu_custom_call.1} parent=35 // pred_region
          %s712 = smul.u32 2, %s30
          %s714 = ssub.s32 1024, 1024
          %715 = vsyncadd %s705, %s714
          %s716 = smul.addr %s29, 8
          %s717 = sadd.s32 %s712, %s716
          %s718 = smul.addr %s717, 128
          %s719 = scalar_lea.hbm %s4, %s718
          %s720 = sshll.u32 %s708, 4
          %s721 = int_to_ptr.vmem [resolvable:$true] %s720
          %726 = dma.vmem_to_hbm [thread:$0]  %s721, 1024, %s719, %s705, 256, 256, 16
        $region56: #{tpu_custom_call.1} parent=35 // pred_fallthru
          _
      $region36: #{tpu_custom_call.1} parent=5 // pred_fallthru
        _
      %p727 = scmp.le.s32.totalorder 2, %s20
      // Predicated region
      $region57: #{tpu_custom_call.1} parent=5 // pred_check
        %p728 = pneg %p727
      $region58: #{tpu_custom_call.1} parent=5 // pred_check_branch
        %730 = sbr.rel (%p728) target = $region60
      $region59: #{tpu_custom_call.1} parent=5 // pred_region
        %s731 = ssub.s32 %s20, 2
        // Predicated region
        $region61: #{tpu_custom_call.1} parent=59 // pred_check
          %p732 = pneg %p168
        $region62: #{tpu_custom_call.1} parent=59 // pred_check_branch
          %734 = sbr.rel (%p732) target = $region64
        $region63: #{tpu_custom_call.1} parent=59 // pred_region
          %s735 = sand.u32 %s153, 1
          %s736 = scalar_lea.sflag [#allocation4], %s735
          %s737 = sand.u32 %s153, 1
          %s738 = smul.addr %s737, 64
          %s739 = scalar_lea.vmem [#allocation10], %s738
          %740 = dma.done %s736, 1024
        $region64: #{tpu_custom_call.1} parent=59 // pred_fallthru
          _
      $region60: #{tpu_custom_call.1} parent=5 // pred_fallthru
        _
    $region6: #{tpu_custom_call.1} parent=1 // loop_footer
      %s24 = sadd.s32 1, %s20
    $region7: #{tpu_custom_call.1} parent=1 // loop_footer_branch
      %19 = sbr.rel target = $region3
    $region8: #{tpu_custom_call.1} parent=1 // loop_exit
      _
    %741 = vsyncpa [#allocation3], 1
    %s742 = scalar_lea.sflag [#allocation3], 1
    %743 = vsyncpa %s742, 1
    %744 = vsyncpa [#allocation6], 1
    %s745 = scalar_lea.sflag [#allocation6], 1
    %746 = vsyncpa %s745, 1
    %747 = vsyncpa [#allocation9], 1
    %748 = vsyncpa [#allocation4], 1
    %s749 = scalar_lea.sflag [#allocation4], 1
    %750 = vsyncpa %s749, 1

</llo_original>
